<compile_context>
chip_gen: v5e
topology: v5e:2x2
jax: 0.10.0
libtpu: 0.0.40
codegen_flags: <defaults>
</compile_context>

<pallas_src>
import functools

import jax
import jax.numpy as jnp
from jax.experimental import pallas as pl
from jax.experimental.pallas import tpu as pltpu

LANES = 128
SUBLANES = 8
_CHUNK_ROWS = 512  # 512 x 128 f32 = 256 KiB per chunk intermediate


@functools.lru_cache(maxsize=None)
def _vmem_capacity_bytes():
    """Physical VMEM per TensorCore; conservative (v7x-sized) fallback."""
    try:
        info = pltpu.get_tpu_info()
        cap = getattr(info, "vmem_capacity_bytes", None)
        if cap:
            return int(cap)
    except Exception:
        pass
    return 64 << 20


def _round_up(x, m):
    return ((x + m - 1) // m) * m


def _dice_partial_kernel(p_ref, t_ref, out_ref, *, tm, chunk, last_valid_rows,
                         lane_rem, steps):
    """Per-block per-lane partial sums.

    out_ref[0] is an (8,128) slab:
      row 0 = sum(sigmoid(p) * t), row 1 = sum(sigmoid(p)), row 2 = sum(t),
      rows 3..7 = 0 (padding so the store is a full, unmasked (8,128) write).
    """

    def block_reduce(masked):
        if masked:
            n_rows = last_valid_rows
            # Rows fully valid inside the last block; the row at `full_rows`
            # (if lane_rem > 0) only has its first lane_rem lanes valid.
            full_rows = last_valid_rows - (1 if lane_rem else 0)
        else:
            n_rows = tm
        n_chunks = pl.cdiv(n_rows, chunk)

        def body(c, carry):
            acc_st, acc_s, acc_t = carry
            i0 = pl.multiple_of(c * chunk, chunk)
            x = p_ref[pl.ds(i0, chunk), :].astype(jnp.float32)
            t = t_ref[pl.ds(i0, chunk), :].astype(jnp.float32)
            # Numerically stable sigmoid:
            #   x >= 0 : 1 / (1 + e^-x)      x < 0 : 1 - 1 / (1 + e^x)
            # exp rides the EUP; approx reciprocal (EUP) + one Newton step
            # (cheap VPU) instead of a full f32 divide.
            e = jnp.exp(-jnp.abs(x))
            d = 1.0 + e
            r = pl.reciprocal(d, approx=True)
            r = r * (2.0 - d * r)
            s = jnp.where(x >= 0.0, r, 1.0 - r)
            if masked:
                row = i0 + jax.lax.broadcasted_iota(jnp.int32, (chunk, LANES), 0)
                col = jax.lax.broadcasted_iota(jnp.int32, (chunk, LANES), 1)
                ok = (row < full_rows) | ((row == full_rows) & (col < lane_rem))
                s = jnp.where(ok, s, 0.0)
                t = jnp.where(ok, t, 0.0)
            acc_st = acc_st + jnp.sum(s * t, axis=0, keepdims=True)
            acc_s = acc_s + jnp.sum(s, axis=0, keepdims=True)
            acc_t = acc_t + jnp.sum(t, axis=0, keepdims=True)
            return acc_st, acc_s, acc_t

        zero = jnp.zeros((1, LANES), jnp.float32)
        acc_st, acc_s, acc_t = jax.lax.fori_loop(
            0, n_chunks, body, (zero, zero, zero))
        # One unmasked full-sublane store instead of three 1x128 masked stores.
        out_ref[0, :, :] = jnp.concatenate(
            [acc_st, acc_s, acc_t,
             jnp.zeros((SUBLANES - 3, LANES), jnp.float32)], axis=0)

    needs_mask = (last_valid_rows != tm) or (lane_rem != 0)
    if not needs_mask:
        block_reduce(False)
    elif steps == 1:
        block_reduce(True)
    else:
        is_last = pl.program_id(0) == pl.num_programs(0) - 1

        @pl.when(jnp.logical_not(is_last))
        def _():
            block_reduce(False)

        @pl.when(is_last)
        def _():
            block_reduce(True)


@functools.partial(jax.jit, static_argnames=("smooth",))
def dice_loss(preds, targets, smooth=1e-6):
    """Pallas implementation of DiceLoss.forward (returns scalar f32)."""
    assert preds.shape == targets.shape
    n = int(preds.size)

    # Keep native dtypes (bf16 / f32 / int): cast happens inside the kernel,
    # so sub-f32 inputs stream at their native HBM footprint.
    p_flat = preds.reshape(-1)
    t_flat = targets.reshape(-1)

    lane_rem = n % LANES
    lane_pad = (-n) % LANES
    if lane_pad:
        # TODO(synk): for very large lane-unaligned inputs this pad copies both
        # arrays once; a manual-DMA (memory_space=pl.ANY) path would avoid it.
        p_flat = jnp.pad(p_flat, (0, lane_pad))
        t_flat = jnp.pad(t_flat, (0, lane_pad))
    rows = (n + lane_pad) // LANES

    p2 = p_flat.reshape(rows, LANES)
    t2 = t_flat.reshape(rows, LANES)

    p_item = jnp.dtype(p2.dtype).itemsize
    t_item = jnp.dtype(t2.dtype).itemsize
    max_item = max(p_item, t_item)

    vmem_cap = _vmem_capacity_bytes()
    # Per-input block target: the kernel is HBM-bound, so use the biggest
    # block the generation's VMEM comfortably allows (v7x: 64 MiB physical).
    target_block_bytes = (6 << 20) if vmem_cap <= (64 << 20) else (8 << 20)

    if rows <= _CHUNK_ROWS:
        # Single block that exactly covers the array (no partial-block reads).
        chunk = tm = rows
        steps = 1
    else:
        chunk = _CHUNK_ROWS
        tm_cap = max(chunk,
                     (target_block_bytes // (LANES * max_item)) // chunk * chunk)
        tm = min(tm_cap, (rows // chunk) * chunk)
        steps = pl.cdiv(rows, tm)
        if steps > 1 and steps % 2 == 1:
            # Prefer an even step count: with a "parallel" grid axis, v7x
            # shards steps across its two TensorCores (no effect on v5e/v6e).
            tm_alt = max(chunk, _round_up(pl.cdiv(rows, steps + 1), chunk))
            if pl.cdiv(rows, tm_alt) % 2 == 0:
                tm = tm_alt
                steps = pl.cdiv(rows, tm)

    last_valid_rows = rows - (steps - 1) * tm

    kernel = functools.partial(
        _dice_partial_kernel, tm=tm, chunk=chunk,
        last_valid_rows=last_valid_rows, lane_rem=lane_rem, steps=steps)

    # VMEM budget: 2 inputs x 2 pipeline buffers x block + per-chunk
    # intermediates / output / slack, clamped to 3/4 of physical VMEM.
    block_in_bytes = tm * LANES * (p_item + t_item)
    vmem_limit = int(min(max(2 * block_in_bytes + (6 << 20), 16 << 20),
                         (vmem_cap * 3) // 4))

    out_bytes = steps * SUBLANES * LANES * 4
    cost = pl.CostEstimate(
        flops=15 * n, transcendentals=n,
        bytes_accessed=int(p2.nbytes + t2.nbytes + out_bytes))

    partials = pl.pallas_call(
        kernel,
        out_shape=jax.ShapeDtypeStruct((steps, SUBLANES, LANES), jnp.float32),
        grid_spec=pltpu.PrefetchScalarGridSpec(
            num_scalar_prefetch=0,
            grid=(steps,),
            in_specs=[
                pl.BlockSpec((tm, LANES), lambda i: (i, 0)),
                pl.BlockSpec((tm, LANES), lambda i: (i, 0)),
            ],
            # Per-block lane-dense partial-sum slots: no cross-step state, so
            # the grid axis is truly parallel.
            out_specs=pl.BlockSpec((1, SUBLANES, LANES), lambda i: (i, 0, 0)),
        ),
        compiler_params=pltpu.CompilerParams(
            dimension_semantics=("parallel",),
            vmem_limit_bytes=vmem_limit),
        cost_estimate=cost,
    )(p2, t2)

    # Tiny final tree reduction in plain XLA.
    sums = jnp.sum(partials[:, :3, :], axis=(0, 2))  # -> (3,)
    intersection, sum_p, sum_t = sums[0], sums[1], sums[2]
    dice_score = (2.0 * intersection + smooth) / (sum_p + sum_t + smooth)
    return 1.0 - dice_score


def _reference_dice_loss(preds, targets, smooth=1e-6):
    p = jax.nn.sigmoid(preds.astype(jnp.float32))
    t = targets.astype(jnp.float32)
    inter = jnp.sum(p * t)
    dice = (2.0 * inter + smooth) / (jnp.sum(p) + jnp.sum(t) + smooth)
    return 1.0 - dice


if __name__ == "__main__":
    key = jax.random.PRNGKey(0)
    kp, kt, kp2, kt2, kp3, kt3 = jax.random.split(key, 6)

    # 1) Segmentation-style NCHW input, lane-aligned (no pad, unmasked path).
    shape = (2, 4, 16, 16)
    preds = jax.random.normal(kp, shape, dtype=jnp.float32)
    targets = (jax.random.uniform(kt, shape) > 0.5).astype(jnp.float32)
    out = jax.block_until_ready(dice_loss(preds, targets))
    ref = _reference_dice_loss(preds, targets)
    assert jnp.allclose(out, ref, atol=1e-5, rtol=1e-5), (out, ref)

    # 2) Odd-sized + bf16 preds: native-dtype streaming + in-kernel lane mask.
    shape2 = (2, 3, 7, 11)
    preds2 = jax.random.normal(kp2, shape2, dtype=jnp.float32).astype(jnp.bfloat16)
    targets2 = (jax.random.uniform(kt2, shape2) > 0.5).astype(jnp.float32)
    out2 = jax.block_until_ready(dice_loss(preds2, targets2))
    ref2 = _reference_dice_loss(preds2, targets2)
    assert jnp.allclose(out2, ref2, atol=1e-4, rtol=1e-4), (out2, ref2)

    # 3) Multi-block case: exercises the chunked fori_loop, the pl.when
    #    last-block mask and the even-step split.
    shape3 = (2, 4, 96, 96)
    preds3 = jax.random.normal(kp3, shape3, dtype=jnp.float32)
    targets3 = (jax.random.uniform(kt3, shape3) > 0.5).astype(jnp.float32)
    out3 = jax.block_until_ready(dice_loss(preds3, targets3))
    ref3 = _reference_dice_loss(preds3, targets3)
    assert jnp.allclose(out3, ref3, atol=3e-5, rtol=3e-5), (out3, ref3)

    print("KERNEL_OK")
</pallas_src>

<mosaic_0001>
module attributes {stable_mosaic.version = 11 : i64} {
  func.func @_dice_partial_kernel(%arg0: i32, %arg1: memref<16x128xf32, #tpu.memory_space<vmem>>, %arg2: memref<16x128xf32, #tpu.memory_space<vmem>>, %arg3: memref<1x8x128xf32, #tpu.memory_space<vmem>>) attributes {dimension_semantics = [#tpu.dimension_semantics<parallel>], iteration_bounds = array<i64: 1>, scalar_prefetch = 0 : i64, scratch_operands = 0 : i64, tpu.core_type = #tpu.core_type<tc>, window_params = [{transform_indices = @transform_0, window_bounds = array<i64: 16, 128>}, {transform_indices = @transform_1, window_bounds = array<i64: 16, 128>}, {transform_indices = @transform_2, window_bounds = array<i64: 1, 8, 128>}]} {
    %cst = arith.constant 0.000000e+00 : f32
    %0 = vector.broadcast %cst : f32 to vector<1x128xf32>
    %c0_i32 = arith.constant 0 : i32
    %c16_i32 = arith.constant 16 : i32
    %1 = arith.muli %c0_i32, %c16_i32 : i32
    %2 = tpu.assume_multiple %1, 16 : i32
    %3 = arith.index_cast %2 : i32 to index
    %c0 = arith.constant 0 : index
    %4 = vector.load %arg1[%3, %c0] : memref<16x128xf32, #tpu.memory_space<vmem>>, vector<16x128xf32>
    %5 = arith.index_cast %2 : i32 to index
    %c0_0 = arith.constant 0 : index
    %6 = vector.load %arg2[%5, %c0_0] : memref<16x128xf32, #tpu.memory_space<vmem>>, vector<16x128xf32>
    %7 = math.absf %4 : vector<16x128xf32>
    %cst_1 = arith.constant 0.000000e+00 : f32
    %8 = vector.broadcast %cst_1 : f32 to vector<16x128xf32>
    %9 = arith.subf %8, %7 : vector<16x128xf32>
    %10 = math.exp %9 : vector<16x128xf32>
    %cst_2 = arith.constant 1.000000e+00 : f32
    %11 = vector.broadcast %cst_2 : f32 to vector<16x128xf32>
    %12 = arith.addf %11, %10 : vector<16x128xf32>
    %13 = tpu.reciprocal %12 {approx = true} : vector<16x128xf32> -> vector<16x128xf32>
    %14 = arith.mulf %12, %13 : vector<16x128xf32>
    %cst_3 = arith.constant 2.000000e+00 : f32
    %15 = vector.broadcast %cst_3 : f32 to vector<16x128xf32>
    %16 = arith.subf %15, %14 : vector<16x128xf32>
    %17 = arith.mulf %13, %16 : vector<16x128xf32>
    %cst_4 = arith.constant 0.000000e+00 : f32
    %18 = vector.broadcast %cst_4 : f32 to vector<16x128xf32>
    %19 = arith.cmpf oge, %4, %18 : vector<16x128xf32>
    %cst_5 = arith.constant 1.000000e+00 : f32
    %20 = vector.broadcast %cst_5 : f32 to vector<16x128xf32>
    %21 = arith.subf %20, %17 : vector<16x128xf32>
    %22 = arith.select %19, %17, %21 : vector<16x128xi1>, vector<16x128xf32>
    %23 = arith.mulf %22, %6 : vector<16x128xf32>
    %cst_6 = arith.constant dense<0.000000e+00> : vector<128xf32>
    %24 = vector.multi_reduction <add>, %23, %cst_6 [0] : vector<16x128xf32> to vector<128xf32>
    %25 = vector.shape_cast %24 : vector<128xf32> to vector<1x128xf32>
    %26 = arith.addf %0, %25 : vector<1x128xf32>
    %cst_7 = arith.constant dense<0.000000e+00> : vector<128xf32>
    %27 = vector.multi_reduction <add>, %22, %cst_7 [0] : vector<16x128xf32> to vector<128xf32>
    %28 = vector.shape_cast %27 : vector<128xf32> to vector<1x128xf32>
    %29 = arith.addf %0, %28 : vector<1x128xf32>
    %cst_8 = arith.constant dense<0.000000e+00> : vector<128xf32>
    %30 = vector.multi_reduction <add>, %6, %cst_8 [0] : vector<16x128xf32> to vector<128xf32>
    %31 = vector.shape_cast %30 : vector<128xf32> to vector<1x128xf32>
    %32 = arith.addf %0, %31 : vector<1x128xf32>
    %c1_i32 = arith.constant 1 : i32
    %cst_9 = arith.constant 0.000000e+00 : f32
    %33 = vector.broadcast %cst_9 : f32 to vector<5x128xf32>
    %34 = tpu.concatenate %26, %29, %32, %33 in 0 : vector<1x128xf32>, vector<1x128xf32>, vector<1x128xf32>, vector<5x128xf32> -> vector<8x128xf32>
    %c0_10 = arith.constant 0 : index
    %c0_11 = arith.constant 0 : index
    %c0_12 = arith.constant 0 : index
    %35 = vector.load %arg3[%c0_10, %c0_11, %c0_12] : memref<1x8x128xf32, #tpu.memory_space<vmem>>, vector<1x8x128xf32>
    %36 = vector.shape_cast %35 : vector<1x8x128xf32> to vector<8x128xf32>
    %37 = vector.shape_cast %34 : vector<8x128xf32> to vector<1x8x128xf32>
    tpu.vector_store %arg3[%c0_10, %c0_11, %c0_12], %37 {strides = array<i32>} : memref<1x8x128xf32, #tpu.memory_space<vmem>>, vector<1x8x128xf32>,
    return
  }
  func.func @transform_0(%arg0: i32) -> (i32, i32) {
    %c0_i32 = arith.constant 0 : i32
    %c0_i32_0 = arith.constant 0 : i32
    return %arg0, %c0_i32 : i32, i32
  }
  func.func @transform_1(%arg0: i32) -> (i32, i32) {
    %c0_i32 = arith.constant 0 : i32
    %c0_i32_0 = arith.constant 0 : i32
    return %arg0, %c0_i32 : i32, i32
  }
  func.func @transform_2(%arg0: i32) -> (i32, i32, i32) {
    %c0_i32 = arith.constant 0 : i32
    %c0_i32_0 = arith.constant 0 : i32
    %c0_i32_1 = arith.constant 0 : i32
    return %arg0, %c0_i32, %c0_i32_0 : i32, i32, i32
  }
}

</mosaic_0001>

<llo_original>
// kernel: dice_loss.1
$region0: #{dice_loss.1}
  #allocation0 [shape = 'u32[]', space=smem, size = 0x4, offset = 0x4, fixed_abs, tag = 'smem constant byte address 0x4 - core index']
  #allocation1 [shape = 'u32[72,128]{1,0:T(1,128)}', space=vmem, size = 0x9000, scoped, tag = 'internal scratch']
  %s0 = inlined_call_operand.vmem [shape: f32[16,128], index: 0, kind: input, shape index: {}]
  %s1 = inlined_call_operand.vmem [shape: f32[16,128], index: 1, kind: input, shape index: {}]
  %s2 = inlined_call_operand.vmem [shape: f32[1,8,128], index: 2, kind: output, shape index: {}]
  %s3 = sld [smem:[#allocation0]]
  $region18: #{dice_loss.1} parent=0
    _
  %s5 = ssub.s32 1, %s3
  %s6 = scalar_select 0, %s5, %s3
  // Predicated region
  $region2: #{dice_loss.1} parent=0 // pred_check
    _
  $region3: #{dice_loss.1} parent=0 // pred_check_branch
    %8 = sbr.rel (0) target = $region5
  $region4: #{dice_loss.1} parent=0 // pred_region
    _
  $region5: #{dice_loss.1} parent=0 // pred_fallthru
    _
  // Predicated region
  $region6: #{dice_loss.1} parent=0 // pred_check
    _
  $region7: #{dice_loss.1} parent=0 // pred_check_branch
    %10 = sbr.rel (0) target = $region9
  $region8: #{dice_loss.1} parent=0 // pred_region
    _
  $region9: #{dice_loss.1} parent=0 // pred_fallthru
    _
  %v11 = vld [vmem:[%s0] sm:$0xff]
  %v12 = vld [vmem:[%s0 + $0x8] sm:$0xff]
  %v13 = vld [vmem:[%s1] sm:$0xff]
  %v14 = vld [vmem:[%s1 + $0x8] sm:$0xff]
  %v15 = vand.u32 2147483647, %v11
  %v16 = vand.u32 2147483647, %v12
  %v17 = vsub.f32 0.0, %v15
  %v18 = vsub.f32 0.0, %v16
  %v19 = vmul.f32 %v17, 1.442695
  %v20 = vpow.pop %v19
  %v21 = vmul.f32 %v18, 1.442695
  %v22 = vpow.pop %v21
  %v23 = vadd.f32 %v20, 1.0
  %v24 = vadd.f32 %v22, 1.0
  %v25 = vrcp.pop %v23
  %v26 = vrcp.pop %v24
  %v27 = vmul.f32 %v23, %v25
  %v28 = vmul.f32 %v24, %v26
  %v29 = vsub.f32 2.0, %v27
  %v30 = vsub.f32 2.0, %v28
  %v31 = vmul.f32 %v25, %v29
  %v32 = vmul.f32 %v26, %v30
  %vm33 = vcmp.ge.f32.partialorder %v11, 0.0
  %vm34 = vcmp.ge.f32.partialorder %v12, 0.0
  %v35 = vsub.f32 1.0, %v31
  %v36 = vsub.f32 1.0, %v32
  %v37 = vsel %vm33, %v31, %v35
  %v38 = vsel %vm34, %v32, %v36
  %v39 = vmul.f32 %v37, %v13
  %v40 = vmul.f32 %v38, %v14
  %v41 = vadd.f32 %v39, %v40
  %v42 = vrot.slane %v41, 4
  %v43 = vadd.f32 %v41, %v42
  %v44 = vrot.slane %v43, 2
  %v45 = vadd.f32 %v43, %v44
  %v46 = vrot.slane %v45, 1
  %v47 = vadd.f32 %v45, %v46
  %v48 = vadd.f32 %v47, 0.0
  %v49 = vadd.f32 %v37, %v38
  %v50 = vrot.slane %v49, 4
  %v51 = vadd.f32 %v49, %v50
  %v52 = vrot.slane %v51, 2
  %v53 = vadd.f32 %v51, %v52
  %v54 = vrot.slane %v53, 1
  %v55 = vadd.f32 %v53, %v54
  %v56 = vadd.f32 %v55, 0.0
  %v57 = vadd.f32 %v13, %v14
  %v58 = vrot.slane %v57, 4
  %v59 = vadd.f32 %v57, %v58
  %v60 = vrot.slane %v59, 2
  %v61 = vadd.f32 %v59, %v60
  %v62 = vrot.slane %v61, 1
  %v63 = vadd.f32 %v61, %v62
  %v64 = vadd.f32 %v63, 0.0
  %vm65 = vcmask 1040384
  %v66 = vsel %vm65, %v48, %v56
  %vm67 = vcmask 1041408
  %v68 = vsel %vm67, %v66, %v64
  %vm69 = vcmask 1042432
  %v70 = vsel %vm69, %v68, 0.0
  %71 = vst [vmem:[%s2] sm:$0xff] %v70
  // Predicated region
  $region10: #{dice_loss.1} parent=0 // pred_check
    _
  $region11: #{dice_loss.1} parent=0 // pred_check_branch
    %73 = sbr.rel (0) target = $region13
  $region12: #{dice_loss.1} parent=0 // pred_region
    _
  $region13: #{dice_loss.1} parent=0 // pred_fallthru
    _
  // Predicated region
  $region14: #{dice_loss.1} parent=0 // pred_check
    _
  $region15: #{dice_loss.1} parent=0 // pred_check_branch
    %75 = sbr.rel (0) target = $region17
  $region16: #{dice_loss.1} parent=0 // pred_region
    _
  $region17: #{dice_loss.1} parent=0 // pred_fallthru
    _

</llo_original>
